<compile_context>
chip_gen: v7x
topology: tpu7x:2x2x1
jax: 0.10.0
libtpu: 0.0.40
codegen_flags: <defaults>
</compile_context>

<pallas_src>
import jax
import jax.numpy as jnp
from jax.experimental import pallas as pl
from jax.experimental.pallas import tpu as pltpu


def _round_up(x, m):
    return (x + m - 1) // m * m


# ---------------------------------------------------------------------------
# Pallas kernels
# ---------------------------------------------------------------------------
def _conv_gemm_stats_kernel(a_ref, w_ref, y_ref, s_ref, q_ref):
    # im2col GEMM tile: (tm, K) x (K, tn) -> f32 accumulator on the MXU,
    # plus per-tile per-channel partial sum / sum-of-squares (BN statistics).
    acc = jnp.dot(a_ref[0], w_ref[...], preferred_element_type=jnp.float32)
    y_ref[0] = acc
    s = jnp.sum(acc, axis=0, keepdims=True)          # (1, tn)
    q = jnp.sum(acc * acc, axis=0, keepdims=True)    # (1, tn)
    # 8-row (sublane-aligned) slab per tile; every row holds the same partial.
    s_ref[...] = jnp.broadcast_to(s, s_ref.shape)
    q_ref[...] = jnp.broadcast_to(q, q_ref.shape)


def _bn_relu_t_kernel(y_ref, scale_ref, shift_ref, o_ref):
    # Fused affine-normalize + ReLU, then transpose the tile so the output is
    # written channel-major (lane-dense rows of length tr).
    z = jnp.maximum(y_ref[0] * scale_ref[...] + shift_ref[...], 0.0)  # (tr, tc)
    o_ref[0] = z.T                                                    # (tc, tr)


# ---------------------------------------------------------------------------
# pallas_call wrappers
# ---------------------------------------------------------------------------
def _conv_gemm_stats(patches, w_mat, tm, tn):
    n, m_pad, k = patches.shape
    coutp = w_mat.shape[1]
    mt = m_pad // tm
    ct = coutp // tn
    return pl.pallas_call(
        _conv_gemm_stats_kernel,
        out_shape=(
            jax.ShapeDtypeStruct((n, m_pad, coutp), jnp.float32),
            jax.ShapeDtypeStruct((n * mt * 8, coutp), jnp.float32),
            jax.ShapeDtypeStruct((n * mt * 8, coutp), jnp.float32),
        ),
        grid_spec=pltpu.PrefetchScalarGridSpec(
            num_scalar_prefetch=0,
            grid=(n, mt, ct),
            in_specs=[
                pl.BlockSpec((1, tm, k), lambda b, i, j: (b, i, 0)),
                pl.BlockSpec((k, tn), lambda b, i, j: (0, j)),
            ],
            out_specs=(
                pl.BlockSpec((1, tm, tn), lambda b, i, j: (b, i, j)),
                pl.BlockSpec((8, tn), lambda b, i, j: (b * mt + i, j)),
                pl.BlockSpec((8, tn), lambda b, i, j: (b * mt + i, j)),
            ),
        ),
        compiler_params=pltpu.CompilerParams(
            dimension_semantics=("parallel", "parallel", "parallel")),
    )(patches, w_mat)


def _bn_relu_transposed(y, scale_row, shift_row, tr, tc):
    n, m_pad, coutp = y.shape
    return pl.pallas_call(
        _bn_relu_t_kernel,
        out_shape=jax.ShapeDtypeStruct((n, coutp, m_pad), jnp.float32),
        grid_spec=pltpu.PrefetchScalarGridSpec(
            num_scalar_prefetch=0,
            grid=(n, m_pad // tr, coutp // tc),
            in_specs=[
                pl.BlockSpec((1, tr, tc), lambda b, i, j: (b, i, j)),
                pl.BlockSpec((1, tc), lambda b, i, j: (0, j)),
                pl.BlockSpec((1, tc), lambda b, i, j: (0, j)),
            ],
            out_specs=pl.BlockSpec((1, tc, tr), lambda b, i, j: (b, j, i)),
        ),
        compiler_params=pltpu.CompilerParams(
            dimension_semantics=("parallel", "parallel", "parallel")),
    )(y, scale_row, shift_row)


# ---------------------------------------------------------------------------
# Glue: im2col + parameter plumbing (plain JAX)
# ---------------------------------------------------------------------------
def _im2col(x_nhwc, kh, kw, stride, padding, m_img_pad):
    n, h, w, c = x_nhwc.shape
    xpad = jnp.pad(x_nhwc, ((0, 0), (padding, padding), (padding, padding), (0, 0)))
    oh = (h + 2 * padding - kh) // stride + 1
    ow = (w + 2 * padding - kw) // stride + 1
    cols = []
    for i in range(kh):
        for j in range(kw):
            cols.append(
                xpad[:, i: i + oh * stride: stride, j: j + ow * stride: stride, :]
            )
    patches = jnp.stack(cols, axis=3)                      # [N, OH, OW, KH*KW, C]
    patches = patches.reshape(n, oh * ow, kh * kw * c)     # K order: (kh, kw, cin)
    if m_img_pad > oh * ow:                                # zero rows: no effect on
        patches = jnp.pad(patches, ((0, 0), (0, m_img_pad - oh * ow), (0, 0)))
    return patches, oh, ow


def conv2d_batchnorm_relu(x_nchw, weight, bias, gamma, beta, stride, padding,
                          eps=1e-5):
    del bias  # exactly cancelled by training-mode BatchNorm mean subtraction
    n, cin, h, w = x_nchw.shape
    cout, _, kh, kw = weight.shape

    oh = (h + 2 * padding - kh) // stride + 1
    ow = (w + 2 * padding - kw) // stride + 1
    m_img = oh * ow
    k = kh * kw * cin

    # Tile / padding choices (lane-dense channels, per-image row padding).
    tm = 256
    m_img_pad = _round_up(m_img, tm)
    cout_pad = _round_up(cout, 128)
    tn = 256 if cout_pad % 256 == 0 else 128
    tr = next(t for t in (1024, 512, 256) if m_img_pad % t == 0)
    tc = 256 if cout_pad % 256 == 0 else 128

    x_nhwc = jnp.transpose(x_nchw, (0, 2, 3, 1)).astype(jnp.float32)
    patches, _, _ = _im2col(x_nhwc, kh, kw, stride, padding, m_img_pad)
    patches = patches.astype(jnp.bfloat16)

    # weight [C_out, C_in, KH, KW] -> [KH, KW, C_in, C_out] -> [K, C_out_pad]
    w_mat = jnp.transpose(weight, (2, 3, 1, 0)).reshape(k, cout).astype(jnp.float32)
    w_mat = jnp.pad(w_mat, ((0, 0), (0, cout_pad - cout))).astype(jnp.bfloat16)

    # 1) conv as GEMM + fused per-tile BN statistics (Pallas, MXU)
    y, s_part, q_part = _conv_gemm_stats(patches, w_mat, tm, tn)

    # 2) tiny reduction of per-tile partials -> scale / shift (plain JAX)
    mt = m_img_pad // tm
    ch_sum = jnp.sum(s_part.reshape(n * mt, 8, cout_pad)[:, 0, :], axis=0)
    ch_sq = jnp.sum(q_part.reshape(n * mt, 8, cout_pad)[:, 0, :], axis=0)
    m_true = float(n * m_img)                        # zero pad rows excluded
    mean = ch_sum / m_true
    var = jnp.maximum(ch_sq / m_true - mean * mean, 0.0)
    inv = jax.lax.rsqrt(var + eps)
    gamma_p = jnp.pad(gamma.astype(jnp.float32), (0, cout_pad - cout))
    beta_p = jnp.pad(beta.astype(jnp.float32), (0, cout_pad - cout))
    scale = (gamma_p * inv).reshape(1, cout_pad)
    shift = (beta_p - mean * gamma_p * inv).reshape(1, cout_pad)

    # 3) fused BN affine + ReLU, written channel-major (Pallas elementwise)
    out_pad = _bn_relu_transposed(y, scale, shift, tr, tc)   # [N, Cp, Mp]

    out = out_pad[:, :cout, :m_img].reshape(n, cout, oh, ow)  # NCHW, no transpose
    return out


# ---------------------------------------------------------------------------
# Pure-JAX reference for correctness checking
# ---------------------------------------------------------------------------
def _reference(x, weight, bias, gamma, beta, stride, padding, eps=1e-5):
    xr = x.astype(jnp.bfloat16).astype(jnp.float32)
    wr = weight.astype(jnp.bfloat16).astype(jnp.float32)
    y = jax.lax.conv_general_dilated(
        xr, wr,
        window_strides=(stride, stride),
        padding=((padding, padding), (padding, padding)),
        dimension_numbers=("NCHW", "OIHW", "NCHW"),
        precision=jax.lax.Precision.HIGHEST,
    )
    y = y + bias.reshape(1, -1, 1, 1)
    mean = jnp.mean(y, axis=(0, 2, 3), keepdims=True)
    var = jnp.var(y, axis=(0, 2, 3), keepdims=True)
    yhat = (y - mean) * jax.lax.rsqrt(var + eps)
    yhat = yhat * gamma.reshape(1, -1, 1, 1) + beta.reshape(1, -1, 1, 1)
    return jnp.maximum(yhat, 0.0)


if __name__ == "__main__":
    # Module config (small, consistent with Conv2DBatchNormRelu.__init__)
    N, C_IN, H, W = 2, 4, 16, 16
    C_OUT, KSIZE, STRIDE, PAD = 8, 3, 1, 1   # dilation=1 (never forwarded), bias=True

    key = jax.random.PRNGKey(0)
    kx, kw_, kb, kg, kbt = jax.random.split(key, 5)

    x = jax.random.normal(kx, (N, C_IN, H, W), dtype=jnp.float32)
    weight = jax.random.normal(kw_, (C_OUT, C_IN, KSIZE, KSIZE), dtype=jnp.float32) * 0.1
    bias = jax.random.normal(kb, (C_OUT,), dtype=jnp.float32) * 0.1
    gamma = 1.0 + 0.1 * jax.random.normal(kg, (C_OUT,), dtype=jnp.float32)
    beta = 0.1 * jax.random.normal(kbt, (C_OUT,), dtype=jnp.float32)

    out = conv2d_batchnorm_relu(x, weight, bias, gamma, beta, STRIDE, PAD)
    out = jax.block_until_ready(out)

    ref = _reference(x, weight, bias, gamma, beta, STRIDE, PAD)
    assert out.shape == (N, C_OUT, H, W), out.shape
    err = float(jnp.max(jnp.abs(out - ref)))
    assert jnp.allclose(out, ref, atol=5e-3, rtol=5e-3), err

    print("KERNEL_OK")
</pallas_src>

<mosaic_0001>
module attributes {stable_mosaic.version = 11 : i64} {
  func.func @_conv_gemm_stats_kernel(%arg0: i32, %arg1: i32, %arg2: i32, %arg3: memref<1x256x36xbf16, #tpu.memory_space<vmem>>, %arg4: memref<36x128xbf16, #tpu.memory_space<vmem>>, %arg5: memref<1x256x128xf32, #tpu.memory_space<vmem>>, %arg6: memref<8x128xf32, #tpu.memory_space<vmem>>, %arg7: memref<8x128xf32, #tpu.memory_space<vmem>>) attributes {dimension_semantics = [#tpu.dimension_semantics<parallel>, #tpu.dimension_semantics<parallel>, #tpu.dimension_semantics<parallel>], iteration_bounds = array<i64: 2, 1, 1>, scalar_prefetch = 0 : i64, scratch_operands = 0 : i64, tpu.core_type = #tpu.core_type<tc>, window_params = [{transform_indices = @transform_0, window_bounds = array<i64: 1, 256, 36>}, {transform_indices = @transform_1, window_bounds = array<i64: 36, 128>}, {transform_indices = @transform_2, window_bounds = array<i64: 1, 256, 128>}, {transform_indices = @transform_3, window_bounds = array<i64: 8, 128>}, {transform_indices = @transform_4, window_bounds = array<i64: 8, 128>}]} {
    %c0 = arith.constant 0 : index
    %c0_0 = arith.constant 0 : index
    %c0_1 = arith.constant 0 : index
    %0 = vector.load %arg3[%c0, %c0_0, %c0_1] : memref<1x256x36xbf16, #tpu.memory_space<vmem>>, vector<1x256x36xbf16>
    %1 = vector.shape_cast %0 : vector<1x256x36xbf16> to vector<256x36xbf16>
    %c0_2 = arith.constant 0 : index
    %c0_3 = arith.constant 0 : index
    %2 = vector.load %arg4[%c0_2, %c0_3] : memref<36x128xbf16, #tpu.memory_space<vmem>>, vector<36x128xbf16>
    %cst = arith.constant dense<0.000000e+00> : vector<256x128xf32>
    %3 = tpu.matmul %1, %2, %cst {dimension_numbers = #tpu.dot_dimension_numbers<[1], [0], [0], [1], [0, 0, 1, 1], [], []>} : vector<256x36xbf16>, vector<36x128xbf16>, vector<256x128xf32> -> vector<256x128xf32>
    %c0_4 = arith.constant 0 : index
    %c0_5 = arith.constant 0 : index
    %c0_6 = arith.constant 0 : index
    %4 = vector.load %arg5[%c0_4, %c0_5, %c0_6] : memref<1x256x128xf32, #tpu.memory_space<vmem>>, vector<1x256x128xf32>
    %5 = vector.shape_cast %4 : vector<1x256x128xf32> to vector<256x128xf32>
    %6 = vector.shape_cast %3 : vector<256x128xf32> to vector<1x256x128xf32>
    tpu.vector_store %arg5[%c0_4, %c0_5, %c0_6], %6 {strides = array<i32>} : memref<1x256x128xf32, #tpu.memory_space<vmem>>, vector<1x256x128xf32>,
    %cst_7 = arith.constant dense<0.000000e+00> : vector<128xf32>
    %7 = vector.multi_reduction <add>, %3, %cst_7 [0] : vector<256x128xf32> to vector<128xf32>
    %8 = vector.shape_cast %7 : vector<128xf32> to vector<1x128xf32>
    %9 = arith.mulf %3, %3 : vector<256x128xf32>
    %cst_8 = arith.constant dense<0.000000e+00> : vector<128xf32>
    %10 = vector.multi_reduction <add>, %9, %cst_8 [0] : vector<256x128xf32> to vector<128xf32>
    %11 = vector.shape_cast %10 : vector<128xf32> to vector<1x128xf32>
    %12 = vector.shape_cast %8 : vector<1x128xf32> to vector<1x128xf32>
    %13 = vector.broadcast %12 : vector<1x128xf32> to vector<8x128xf32>
    %c0_9 = arith.constant 0 : index
    %c0_10 = arith.constant 0 : index
    %14 = vector.load %arg6[%c0_9, %c0_10] : memref<8x128xf32, #tpu.memory_space<vmem>>, vector<8x128xf32>
    tpu.vector_store %arg6[%c0_9, %c0_10], %13 {strides = array<i32>} : memref<8x128xf32, #tpu.memory_space<vmem>>, vector<8x128xf32>,
    %15 = vector.shape_cast %11 : vector<1x128xf32> to vector<1x128xf32>
    %16 = vector.broadcast %15 : vector<1x128xf32> to vector<8x128xf32>
    %c0_11 = arith.constant 0 : index
    %c0_12 = arith.constant 0 : index
    %17 = vector.load %arg7[%c0_11, %c0_12] : memref<8x128xf32, #tpu.memory_space<vmem>>, vector<8x128xf32>
    tpu.vector_store %arg7[%c0_11, %c0_12], %16 {strides = array<i32>} : memref<8x128xf32, #tpu.memory_space<vmem>>, vector<8x128xf32>,
    return
  }
  func.func @transform_0(%arg0: i32, %arg1: i32, %arg2: i32) -> (i32, i32, i32) {
    %c0_i32 = arith.constant 0 : i32
    %c0_i32_0 = arith.constant 0 : i32
    return %arg0, %arg1, %c0_i32 : i32, i32, i32
  }
  func.func @transform_1(%arg0: i32, %arg1: i32, %arg2: i32) -> (i32, i32) {
    %c0_i32 = arith.constant 0 : i32
    %c0_i32_0 = arith.constant 0 : i32
    return %c0_i32, %arg2 : i32, i32
  }
  func.func @transform_2(%arg0: i32, %arg1: i32, %arg2: i32) -> (i32, i32, i32) {
    %c0_i32 = arith.constant 0 : i32
    return %arg0, %arg1, %arg2 : i32, i32, i32
  }
  func.func @transform_3(%arg0: i32, %arg1: i32, %arg2: i32) -> (i32, i32) {
    %c1_i32 = arith.constant 1 : i32
    %0 = arith.muli %arg0, %c1_i32 : i32
    %1 = arith.addi %0, %arg1 : i32
    %c0_i32 = arith.constant 0 : i32
    return %1, %arg2 : i32, i32
  }
  func.func @transform_4(%arg0: i32, %arg1: i32, %arg2: i32) -> (i32, i32) {
    %c1_i32 = arith.constant 1 : i32
    %0 = arith.muli %arg0, %c1_i32 : i32
    %1 = arith.addi %0, %arg1 : i32
    %c0_i32 = arith.constant 0 : i32
    return %1, %arg2 : i32, i32
  }
}

</mosaic_0001>

<llo_original>
// kernel: tpu_custom_call.1
$region0: #{tpu_custom_call.1}
  #allocation0 [shape = 'u32[]', space=smem, size = 0x4, offset = 0x4, fixed_abs, tag = 'smem constant byte address 0x4 - core index']
  #allocation1 [shape = 'u32[144,128]{1,0:T(1,128)}', space=vmem, size = 0x12000, scoped, tag = 'internal scratch']
  %s0 = inlined_call_operand.vmem [shape: bf16[2,256,36], index: 0, kind: input, shape index: {}]
  %s1 = inlined_call_operand.vmem [shape: bf16[36,128], index: 1, kind: input, shape index: {}]
  %s2 = inlined_call_operand.hbm [shape: f32[2,256,128], index: 2, kind: output, shape index: {0}]
  %s3 = inlined_call_operand.hbm [shape: f32[16,128], index: 3, kind: output, shape index: {1}]
  %s4 = inlined_call_operand.hbm [shape: f32[16,128], index: 4, kind: output, shape index: {2}]
  %5 = xla_tuple %s2, %s3, %s4
  %s6 = sld [smem:[#allocation0]]
  $region57: #{tpu_custom_call.1} parent=0
    _
  %s8 = ssub.s32 1, %s6
  %s9 = scalar_select 0, %s8, %s6
  $region1: #{tpu_custom_call.1} parent=0
    #allocation2 [shape = 'u8[262144]{0}', space=vmem, size = 0x40000, scoped, tag = 'output window, operand 0']
    #allocation3 [shape = 's32[2]{0}', space=sflag, size = 0x8, scoped, tag = 'scoped memory for tpu_custom_call.1']
    #allocation4 [shape = 'u8[8192]{0}', space=vmem, size = 0x2000, scoped, tag = 'output window, operand 1']
    #allocation5 [shape = 's32[2]{0}', space=sflag, size = 0x8, scoped, tag = 'scoped memory for tpu_custom_call.1']
    #allocation6 [shape = 'u8[8192]{0}', space=vmem, size = 0x2000, scoped, tag = 'output window, operand 2']
    %10 = vsyncpa [#allocation3], 0
    %s11 = scalar_lea.sflag [#allocation3], 1
    %12 = vsyncpa %s11, 0
    %13 = vsyncpa [#allocation5], 0
    %s14 = scalar_lea.sflag [#allocation5], 1
    %15 = vsyncpa %s14, 0
    loop: start=0, step=1, limit=4
    $region2: #{tpu_custom_call.1} parent=1 // loop_pre_header
      _
    $region3: #{tpu_custom_call.1} parent=1 // loop_header
      %s17 = sphi 0, %s21
      %p18 = scmp.ge.s32.totalorder %s17, 4
      %s24 = sphi 0, %s43
      %s25 = sphi 0, %s39
      %s26 = sphi 0, %s35
      %s27 = sphi 0, %s24
      %s28 = sphi 0, %s25
      %s29 = sphi 0, %s26
      %s30 = sphi 0, %s27
      %s31 = sphi 0, %s28
      %s32 = sphi 0, %s29
      %s48 = sphi 0, %s50
      %s51 = sphi 0, %s48
      %s52 = sphi 0, %s51
      %s68 = sphi 0, %s52
      %s74 = sphi 0, %s76
      %s77 = sphi 0, %s74
      %s78 = sphi 0, %s77
      %s94 = sphi 0, %s78
      %s104 = sphi 0, %s106
      %s107 = sphi 0, %s104
      %s108 = sphi 0, %s107
      %s124 = sphi 0, %s108
      %s134 = sphi 0, %s136
      %s137 = sphi 0, %s134
      %s138 = sphi 0, %s137
      %s154 = sphi 0, %s138
      %s164 = sphi 0, %s166
      %s167 = sphi 0, %s164
      %s168 = sphi 0, %s167
      %s184 = sphi 0, %s168
    $region4: #{tpu_custom_call.1} parent=1 // loop_header_branch
      %20 = sbr.rel (%p18) target = $region8
    $region5: #{tpu_custom_call.1} parent=1 // loop_body
      %s22 = ssub.s32 %s17, 1
      %s23 = ssub.s32 %s17, 2
      %s33 = sadd.s32 1, %s26
      %p34 = scmp.ge.s32.totalorder %s33, 1
      %s35 = scalar_select %p34, 0, %s33
      %s36 = sadd.s32 1, %s25
      %s37 = scalar_select %p34, %s36, %s25
      %p38 = scmp.ge.s32.totalorder %s37, 1
      %s39 = scalar_select %p38, 0, %s37
      %s40 = sadd.s32 1, %s24
      %s41 = scalar_select %p38, %s40, %s24
      %p42 = scmp.ge.s32.totalorder %s41, 2
      %s43 = scalar_select %p42, 0, %s41
      %s44 = ssub.s32 %s24, %s43
      %s45 = ssub.s32 %s25, %s39
      %s46 = sor.u32 %s44, %s45
      %p47 = scmp.eq.s32.totalorder %s46, 0
      %s49 = sadd.s32 %s48, 1
      %s50 = scalar_select %p47, %s48, %s49
      %p53 = pneg %p47
      %p54 = scmp.eq.s32.totalorder %s17, 1
      %p55 = por %p53, %p54
      %p56 = scmp.ne.s32.totalorder %s48, %s51
      %p57 = scmp.eq.s32.totalorder %s17, 0
      %p58 = por %p56, %p57
      %p59 = scmp.ne.s32.totalorder %s48, %s51
      %p60 = scmp.eq.s32.totalorder %s22, 1
      %p61 = por %p59, %p60
      %p62 = scmp.ne.s32.totalorder %s51, %s52
      %p63 = scmp.eq.s32.totalorder %s22, 0
      %p64 = por %p62, %p63
      %p65 = scmp.ne.s32.totalorder %s51, %s52
      %p66 = scmp.eq.s32.totalorder %s23, 1
      %p67 = por %p65, %p66
      %p69 = scmp.ne.s32.totalorder %s52, %s68
      %p70 = scmp.eq.s32.totalorder %s23, 0
      %p71 = por %p69, %p70
      %s72 = ssub.s32 %s26, %s35
      %p73 = scmp.eq.s32.totalorder %s72, 0
      %s75 = sadd.s32 %s74, 1
      %s76 = scalar_select %p73, %s74, %s75
      %p79 = pneg %p73
      %p80 = scmp.eq.s32.totalorder %s17, 1
      %p81 = por %p79, %p80
      %p82 = scmp.ne.s32.totalorder %s74, %s77
      %p83 = scmp.eq.s32.totalorder %s17, 0
      %p84 = por %p82, %p83
      %p85 = scmp.ne.s32.totalorder %s74, %s77
      %p86 = scmp.eq.s32.totalorder %s22, 1
      %p87 = por %p85, %p86
      %p88 = scmp.ne.s32.totalorder %s77, %s78
      %p89 = scmp.eq.s32.totalorder %s22, 0
      %p90 = por %p88, %p89
      %p91 = scmp.ne.s32.totalorder %s77, %s78
      %p92 = scmp.eq.s32.totalorder %s23, 1
      %p93 = por %p91, %p92
      %p95 = scmp.ne.s32.totalorder %s78, %s94
      %p96 = scmp.eq.s32.totalorder %s23, 0
      %p97 = por %p95, %p96
      %s98 = ssub.s32 %s24, %s43
      %s99 = ssub.s32 %s25, %s39
      %s100 = sor.u32 %s98, %s99
      %s101 = ssub.s32 %s26, %s35
      %s102 = sor.u32 %s100, %s101
      %p103 = scmp.eq.s32.totalorder %s102, 0
      %s105 = sadd.s32 %s104, 1
      %s106 = scalar_select %p103, %s104, %s105
      %p109 = pneg %p103
      %p110 = scmp.eq.s32.totalorder %s17, 1
      %p111 = por %p109, %p110
      %p112 = scmp.ne.s32.totalorder %s104, %s107
      %p113 = scmp.eq.s32.totalorder %s17, 0
      %p114 = por %p112, %p113
      %p115 = scmp.ne.s32.totalorder %s104, %s107
      %p116 = scmp.eq.s32.totalorder %s22, 1
      %p117 = por %p115, %p116
      %p118 = scmp.ne.s32.totalorder %s107, %s108
      %p119 = scmp.eq.s32.totalorder %s22, 0
      %p120 = por %p118, %p119
      %p121 = scmp.ne.s32.totalorder %s107, %s108
      %p122 = scmp.eq.s32.totalorder %s23, 1
      %p123 = por %p121, %p122
      %p125 = scmp.ne.s32.totalorder %s108, %s124
      %p126 = scmp.eq.s32.totalorder %s23, 0
      %p127 = por %p125, %p126
      %s128 = sadd.s32 %s24, %s25
      %s129 = sadd.s32 %s43, %s39
      %s130 = ssub.s32 %s128, %s129
      %s131 = ssub.s32 %s26, %s35
      %s132 = sor.u32 %s130, %s131
      %p133 = scmp.eq.s32.totalorder %s132, 0
      %s135 = sadd.s32 %s134, 1
      %s136 = scalar_select %p133, %s134, %s135
      %p139 = pneg %p133
      %p140 = scmp.eq.s32.totalorder %s17, 1
      %p141 = por %p139, %p140
      %p142 = scmp.ne.s32.totalorder %s134, %s137
      %p143 = scmp.eq.s32.totalorder %s17, 0
      %p144 = por %p142, %p143
      %p145 = scmp.ne.s32.totalorder %s134, %s137
      %p146 = scmp.eq.s32.totalorder %s22, 1
      %p147 = por %p145, %p146
      %p148 = scmp.ne.s32.totalorder %s137, %s138
      %p149 = scmp.eq.s32.totalorder %s22, 0
      %p150 = por %p148, %p149
      %p151 = scmp.ne.s32.totalorder %s137, %s138
      %p152 = scmp.eq.s32.totalorder %s23, 1
      %p153 = por %p151, %p152
      %p155 = scmp.ne.s32.totalorder %s138, %s154
      %p156 = scmp.eq.s32.totalorder %s23, 0
      %p157 = por %p155, %p156
      %s158 = sadd.s32 %s24, %s25
      %s159 = sadd.s32 %s43, %s39
      %s160 = ssub.s32 %s158, %s159
      %s161 = ssub.s32 %s26, %s35
      %s162 = sor.u32 %s160, %s161
      %p163 = scmp.eq.s32.totalorder %s162, 0
      %s165 = sadd.s32 %s164, 1
      %s166 = scalar_select %p163, %s164, %s165
      %p169 = pneg %p163
      %p170 = scmp.eq.s32.totalorder %s17, 1
      %p171 = por %p169, %p170
      %p172 = scmp.ne.s32.totalorder %s164, %s167
      %p173 = scmp.eq.s32.totalorder %s17, 0
      %p174 = por %p172, %p173
      %p175 = scmp.ne.s32.totalorder %s164, %s167
      %p176 = scmp.eq.s32.totalorder %s22, 1
      %p177 = por %p175, %p176
      %p178 = scmp.ne.s32.totalorder %s167, %s168
      %p179 = scmp.eq.s32.totalorder %s22, 0
      %p180 = por %p178, %p179
      %p181 = scmp.ne.s32.totalorder %s167, %s168
      %p182 = scmp.eq.s32.totalorder %s23, 1
      %p183 = por %p181, %p182
      %p185 = scmp.ne.s32.totalorder %s168, %s184
      %p186 = scmp.eq.s32.totalorder %s23, 0
      %p187 = por %p185, %p186
      %p188 = scmp.le.s32.totalorder 1, %s17
      %p189 = scmp.lt.s32.totalorder %s17, 3
      %p190 = pnand %p188, %p189
      %p191 = pneg %p190
      // Predicated region
      $region9: #{tpu_custom_call.1} parent=5 // pred_check
        _
      $region10: #{tpu_custom_call.1} parent=5 // pred_check_branch
        %193 = sbr.rel (%p190) target = $region12
      $region11: #{tpu_custom_call.1} parent=5 // pred_region
        %s194 = ssub.s32 %s17, 1
        // Predicated region
        $region13: #{tpu_custom_call.1} parent=11 // pred_check
          %p195 = pneg %p90
        $region14: #{tpu_custom_call.1} parent=11 // pred_check_branch
          %197 = sbr.rel (%p195) target = $region16
        $region15: #{tpu_custom_call.1} parent=11 // pred_region
          %p198 = scmp.lt.s32.totalorder %s29, 0
          %s199 = scalar_select %p198, %s29, 0
          %s200 = smul.addr %s199, 4
          %s201 = scalar_lea.vmem %s1, %s200
        $region16: #{tpu_custom_call.1} parent=11 // pred_fallthru
          _
      $region12: #{tpu_custom_call.1} parent=5 // pred_fallthru
        _
      %p202 = scmp.lt.s32.totalorder %s17, 2
      // Predicated region
      $region17: #{tpu_custom_call.1} parent=5 // pred_check
        %p203 = pneg %p202
      $region18: #{tpu_custom_call.1} parent=5 // pred_check_branch
        %205 = sbr.rel (%p203) target = $region20
      $region19: #{tpu_custom_call.1} parent=5 // pred_region
        // Predicated region
        $region21: #{tpu_custom_call.1} parent=19 // pred_check
          %p206 = pneg %p58
        $region22: #{tpu_custom_call.1} parent=19 // pred_check_branch
          %208 = sbr.rel (%p206) target = $region24
        $region23: #{tpu_custom_call.1} parent=19 // pred_region
          %s209 = smul.u32 32, %s25
          %p210 = scmp.lt.s32.totalorder %s24, 1
          %s211 = scalar_select %p210, %s24, 1
          %p212 = scmp.lt.s32.totalorder %s209, 31
          %s213 = scalar_select %p212, %s209, 31
          %s214 = smul.addr %s211, 32
          %s215 = sadd.s32 %s213, %s214
          %s216 = smul.addr %s215, 4
          %s217 = scalar_lea.vmem %s0, %s216
          %s218 = smul.u32 32, %s25
        $region24: #{tpu_custom_call.1} parent=19 // pred_fallthru
          _
      $region20: #{tpu_custom_call.1} parent=5 // pred_fallthru
        _
      %p219 = scmp.le.s32.totalorder 1, %s17
      %p220 = scmp.lt.s32.totalorder %s17, 3
      %p221 = pnand %p219, %p220
      %p222 = pneg %p221
      // Predicated region
      $region25: #{tpu_custom_call.1} parent=5 // pred_check
        _
      $region26: #{tpu_custom_call.1} parent=5 // pred_check_branch
        %224 = sbr.rel (%p221) target = $region28
      $region27: #{tpu_custom_call.1} parent=5 // pred_region
        %s225 = ssub.s32 %s17, 1
        %s226 = smul.u32 32, %s28
        %p227 = scmp.lt.s32.totalorder %s27, 1
        %s228 = scalar_select %p227, %s27, 1
        %p229 = scmp.lt.s32.totalorder %s226, 31
        %s230 = scalar_select %p229, %s226, 31
        %s231 = smul.addr %s228, 32
        %s232 = sadd.s32 %s230, %s231
        %s233 = smul.addr %s232, 4
        %s234 = scalar_lea.vmem %s0, %s233
        %p235 = pneg %p64
        %p236 = pneg %p61
        %p237 = scmp.lt.s32.totalorder %s29, 0
        %s238 = scalar_select %p237, %s29, 0
        %s239 = smul.addr %s238, 4
        %s240 = scalar_lea.vmem %s1, %s239
        %p241 = pneg %p90
        %p242 = pneg %p87
        %p243 = pneg %p120
        %p244 = pneg %p117
        %s245 = sand.u32 %s107, 1
        %s246 = scalar_lea.sflag [#allocation3], %s245
        %s247 = sand.u32 %s107, 1
        %s248 = smul.addr %s247, 256
        %s249 = scalar_lea.vmem [#allocation2], %s248
        %p250 = pneg %p150
        %p251 = pneg %p147
        %s252 = sand.u32 %s22, 1
        %s253 = scalar_lea.sflag [#allocation5], %s252
        %s254 = sand.u32 %s137, 1
        %s255 = smul.addr %s254, 8
        %s256 = scalar_lea.vmem [#allocation4], %s255
        %p257 = pneg %p180
        %p258 = pneg %p177
        %s259 = sand.u32 %s22, 1
        %s260 = scalar_lea.sflag [#allocation5], %s259
        %s261 = sand.u32 %s167, 1
        %s262 = smul.addr %s261, 8
        %s263 = scalar_lea.vmem [#allocation6], %s262
        %s264 = smul.u32 32, %s28
        %p265 = scmp.lt.s32.totalorder %s27, 1
        %s266 = scalar_select %p265, %s27, 1
        %p267 = scmp.lt.s32.totalorder %s264, 31
        %s268 = scalar_select %p267, %s264, 31
        %s269 = smul.addr %s266, 32
        %s270 = sadd.s32 %s268, %s269
        %s271 = smul.addr %s270, 4
        %s272 = scalar_lea.vmem %s0, %s271
        %s273 = smul.u32 32, %s28
        %p274 = scmp.lt.s32.totalorder %s29, 0
        %s275 = scalar_select %p274, %s29, 0
        %s276 = smul.addr %s275, 4
        %s277 = scalar_lea.vmem %s1, %s276
        %s278 = smul.u32 32, %s28
        %s279 = sadd.s32 %s27, %s28
        %s280 = sadd.s32 %s27, %s28
        %v282 = vld [vmem:[%s272] sm:$0xf]
        %v283 = vld [vmem:[%s272 + $0x4] sm:$0xf]
        %v284 = vld [vmem:[%s272 + $0x8] sm:$0xf]
        %v285 = vld [vmem:[%s272 + $0xc] sm:$0xf]
        %v286 = vld [vmem:[%s272 + $0x10] sm:$0xf]
        %v287 = vld [vmem:[%s272 + $0x14] sm:$0xf]
        %v288 = vld [vmem:[%s272 + $0x18] sm:$0xf]
        %v289 = vld [vmem:[%s272 + $0x1c] sm:$0xf]
        %v290 = vld [vmem:[%s272 + $0x20] sm:$0xf]
        %v291 = vld [vmem:[%s272 + $0x24] sm:$0xf]
        %v292 = vld [vmem:[%s272 + $0x28] sm:$0xf]
        %v293 = vld [vmem:[%s272 + $0x2c] sm:$0xf]
        %v294 = vld [vmem:[%s272 + $0x30] sm:$0xf]
        %v295 = vld [vmem:[%s272 + $0x34] sm:$0xf]
        %v296 = vld [vmem:[%s272 + $0x38] sm:$0xf]
        %v297 = vld [vmem:[%s272 + $0x3c] sm:$0xf]
        %v298 = vld [vmem:[%s272 + $0x40] sm:$0xf]
        %v299 = vld [vmem:[%s272 + $0x44] sm:$0xf]
        %v300 = vld [vmem:[%s272 + $0x48] sm:$0xf]
        %v301 = vld [vmem:[%s272 + $0x4c] sm:$0xf]
        %v302 = vld [vmem:[%s272 + $0x50] sm:$0xf]
        %v303 = vld [vmem:[%s272 + $0x54] sm:$0xf]
        %v304 = vld [vmem:[%s272 + $0x58] sm:$0xf]
        %v305 = vld [vmem:[%s272 + $0x5c] sm:$0xf]
        %v306 = vld [vmem:[%s272 + $0x60] sm:$0xf]
        %v307 = vld [vmem:[%s272 + $0x64] sm:$0xf]
        %v308 = vld [vmem:[%s272 + $0x68] sm:$0xf]
        %v309 = vld [vmem:[%s272 + $0x6c] sm:$0xf]
        %v310 = vld [vmem:[%s272 + $0x70] sm:$0xf]
        %v311 = vld [vmem:[%s272 + $0x74] sm:$0xf]
        %v312 = vld [vmem:[%s272 + $0x78] sm:$0xf]
        %v313 = vld [vmem:[%s272 + $0x7c] sm:$0xf]
        %v314 = vld [vmem:[%s277] sm:$0xf]
        %v315 = vld [vmem:[%s277 + $0x4] sm:$0xf]
        %v316 = vld [vmem:[%s277 + $0x8] sm:$0xf]
        %v317 = vld [vmem:[%s277 + $0xc] sm:$0xf]
        %v318 = vld [vmem:[%s277 + $0x10] sm:$0x3]
        %v351 = vunpack.c.l.b16 %v282
        %v352 = vunpack.c.l.b16 %v283
        %v353 = vunpack.c.l.b16 %v284
        %v354 = vunpack.c.l.b16 %v285
        %v355 = vunpack.c.l.b16 %v286
        %v356 = vunpack.c.l.b16 %v287
        %v357 = vunpack.c.l.b16 %v288
        %v358 = vunpack.c.l.b16 %v289
        %v359 = vunpack.c.l.b16 %v290
        %v360 = vunpack.c.l.b16 %v291
        %v361 = vunpack.c.l.b16 %v292
        %v362 = vunpack.c.l.b16 %v293
        %v363 = vunpack.c.l.b16 %v294
        %v364 = vunpack.c.l.b16 %v295
        %v365 = vunpack.c.l.b16 %v296
        %v366 = vunpack.c.l.b16 %v297
        %v367 = vunpack.c.l.b16 %v298
        %v368 = vunpack.c.l.b16 %v299
        %v369 = vunpack.c.l.b16 %v300
        %v370 = vunpack.c.l.b16 %v301
        %v371 = vunpack.c.l.b16 %v302
        %v372 = vunpack.c.l.b16 %v303
        %v373 = vunpack.c.l.b16 %v304
        %v374 = vunpack.c.l.b16 %v305
        %v375 = vunpack.c.l.b16 %v306
        %v376 = vunpack.c.l.b16 %v307
        %v377 = vunpack.c.l.b16 %v308
        %v378 = vunpack.c.l.b16 %v309
        %v379 = vunpack.c.l.b16 %v310
        %v380 = vunpack.c.l.b16 %v311
        %v381 = vunpack.c.l.b16 %v312
        %v382 = vunpack.c.l.b16 %v313
        %v383 = vpack.c.b16 %v352, %v351
        %v384 = vpack.c.b16 %v354, %v353
        %v385 = vpack.c.b16 %v356, %v355
        %v386 = vpack.c.b16 %v358, %v357
        %v387 = vpack.c.b16 %v360, %v359
        %v388 = vpack.c.b16 %v362, %v361
        %v389 = vpack.c.b16 %v364, %v363
        %v390 = vpack.c.b16 %v366, %v365
        %v391 = vpack.c.b16 %v368, %v367
        %v392 = vpack.c.b16 %v370, %v369
        %v393 = vpack.c.b16 %v372, %v371
        %v394 = vpack.c.b16 %v374, %v373
        %v395 = vpack.c.b16 %v376, %v375
        %v396 = vpack.c.b16 %v378, %v377
        %v397 = vpack.c.b16 %v380, %v379
        %v398 = vpack.c.b16 %v382, %v381
        %v404 = vunpack.c.l.b16 %v314
        %v405 = vunpack.c.l.b16 %v315
        %v406 = vunpack.c.l.b16 %v316
        %v407 = vunpack.c.l.b16 %v317
        %v408 = vunpack.c.l.b16 %v318
        %v409 = vpack.c.b16 %v405, %v404
        %v410 = vpack.c.b16 %v407, %v406
        %v411 = vpack.c.b16 %v408, %v408
        %vm414 = vcmask 293888
        %v416 = vsel %vm414, %v383, 0
        %v419 = vsel %vm414, %v384, 0
        %v422 = vsel %vm414, %v385, 0
        %v425 = vsel %vm414, %v386, 0
        %v428 = vsel %vm414, %v387, 0
        %v431 = vsel %vm414, %v388, 0
        %v434 = vsel %vm414, %v389, 0
        %v437 = vsel %vm414, %v390, 0
        %v440 = vsel %vm414, %v391, 0
        %v443 = vsel %vm414, %v392, 0
        %v446 = vsel %vm414, %v393, 0
        %v449 = vsel %vm414, %v394, 0
        %v452 = vsel %vm414, %v395, 0
        %v455 = vsel %vm414, %v396, 0
        %v458 = vsel %vm414, %v397, 0
        %v461 = vsel %vm414, %v398, 0
        %vm463 = vcmask 1041408
        %v465 = vsel %vm463, %v411, 0
        %467 = vmatprep.subr.bf16.mxu0 0
        %468 = vmatpush1.bf16.msra.mxu0 %v409
        %469 = vmatprep.subr.bf16.mxu0 0
        %470 = vmatpush1.bf16.msra.mxu0 %v410
        %471 = vmatprep.subr.bf16.mxu0 0
        %472 = vmatpush1.bf16.msra.mxu0 %v465
        %473 = vmatprep.subr.bf16.mxu0 0
        %474 = vmatpush1.bf16.msra.mxu0 0
        %475 = vmatprep.subr.bf16.mxu0 0
        %476 = vmatpush1.bf16.msra.mxu0 0
        %477 = vmatprep.subr.bf16.mxu0 0
        %478 = vmatpush1.bf16.msra.mxu0 0
        %479 = vmatprep.subr.bf16.mxu0 0
        %480 = vmatpush1.bf16.msra.mxu0 0
        %481 = vmatprep.subr.bf16.mxu0 0
        %482 = vmatpush1.bf16.msra.mxu0 0
        %483 = vmatprep.subr.bf16.mxu0 0
        %484 = vmatpush1.bf16.msra.mxu0 0
        %485 = vmatprep.subr.bf16.mxu0 0
        %486 = vmatpush1.bf16.msra.mxu0 0
        %487 = vmatprep.subr.bf16.mxu0 0
        %488 = vmatpush1.bf16.msra.mxu0 0
        %489 = vmatprep.subr.bf16.mxu0 0
        %490 = vmatpush1.bf16.msra.mxu0 0
        %491 = vmatprep.subr.bf16.mxu0 0
        %492 = vmatpush1.bf16.msra.mxu0 0
        %493 = vmatprep.subr.bf16.mxu0 0
        %494 = vmatpush1.bf16.msra.mxu0 0
        %495 = vmatprep.subr.bf16.mxu0 0
        %496 = vmatpush1.bf16.msra.mxu0 0
        %497 = vmatprep.subr.bf16.mxu0 0
        %498 = vmatpush1.bf16.msra.mxu0 0
        %499 = vmatprep.mubr.bf16.mxu0 0
        %500 = vmatmul.mubr.bf16.gmra.mrb[0].mxu0 %v416
        %v501 = vpop.f32.mrb[0].mxu0
        %v502 = vadd.f32 0.0, %v501
        %v503 = vpop.f32.mrb[0].mxu0
        %v504 = vpop.f32.mrb[0].mxu0
        %v505 = vadd.f32 0.0, %v504
        %v506 = vpop.f32.mrb[0].mxu0
        %507 = vmatprep.mubr.bf16.mxu0 0
        %508 = vmatmul.mubr.bf16.gmra.mrb[0].mxu0 %v419
        %v509 = vpop.f32.mrb[0].mxu0
        %v510 = vadd.f32 0.0, %v509
        %v511 = vpop.f32.mrb[0].mxu0
        %v512 = vpop.f32.mrb[0].mxu0
        %v513 = vadd.f32 0.0, %v512
        %v514 = vpop.f32.mrb[0].mxu0
        %515 = vmatprep.mubr.bf16.mxu0 0
        %516 = vmatmul.mubr.bf16.gmra.mrb[0].mxu0 %v422
        %v517 = vpop.f32.mrb[0].mxu0
        %v518 = vadd.f32 0.0, %v517
        %v519 = vpop.f32.mrb[0].mxu0
        %v520 = vpop.f32.mrb[0].mxu0
        %v521 = vadd.f32 0.0, %v520
        %v522 = vpop.f32.mrb[0].mxu0
        %523 = vmatprep.mubr.bf16.mxu0 0
        %524 = vmatmul.mubr.bf16.gmra.mrb[0].mxu0 %v425
        %v525 = vpop.f32.mrb[0].mxu0
        %v526 = vadd.f32 0.0, %v525
        %v527 = vpop.f32.mrb[0].mxu0
        %v528 = vpop.f32.mrb[0].mxu0
        %v529 = vadd.f32 0.0, %v528
        %v530 = vpop.f32.mrb[0].mxu0
        %531 = vmatprep.mubr.bf16.mxu0 0
        %532 = vmatmul.mubr.bf16.gmra.mrb[0].mxu0 %v428
        %v533 = vpop.f32.mrb[0].mxu0
        %v534 = vadd.f32 0.0, %v533
        %v535 = vpop.f32.mrb[0].mxu0
        %v536 = vpop.f32.mrb[0].mxu0
        %v537 = vadd.f32 0.0, %v536
        %v538 = vpop.f32.mrb[0].mxu0
        %539 = vmatprep.mubr.bf16.mxu0 0
        %540 = vmatmul.mubr.bf16.gmra.mrb[0].mxu0 %v431
        %v541 = vpop.f32.mrb[0].mxu0
        %v542 = vadd.f32 0.0, %v541
        %v543 = vpop.f32.mrb[0].mxu0
        %v544 = vpop.f32.mrb[0].mxu0
        %v545 = vadd.f32 0.0, %v544
        %v546 = vpop.f32.mrb[0].mxu0
        %547 = vmatprep.mubr.bf16.mxu0 0
        %548 = vmatmul.mubr.bf16.gmra.mrb[0].mxu0 %v434
        %v549 = vpop.f32.mrb[0].mxu0
        %v550 = vadd.f32 0.0, %v549
        %v551 = vpop.f32.mrb[0].mxu0
        %v552 = vpop.f32.mrb[0].mxu0
        %v553 = vadd.f32 0.0, %v552
        %v554 = vpop.f32.mrb[0].mxu0
        %555 = vmatprep.mubr.bf16.mxu0 0
        %556 = vmatmul.mubr.bf16.gmra.mrb[0].mxu0 %v437
        %v557 = vpop.f32.mrb[0].mxu0
        %v558 = vadd.f32 0.0, %v557
        %v559 = vpop.f32.mrb[0].mxu0
        %v560 = vpop.f32.mrb[0].mxu0
        %v561 = vadd.f32 0.0, %v560
        %v562 = vpop.f32.mrb[0].mxu0
        %563 = vmatprep.mubr.bf16.mxu0 0
        %564 = vmatmul.mubr.bf16.gmra.mrb[0].mxu0 %v440
        %v565 = vpop.f32.mrb[0].mxu0
        %v566 = vadd.f32 0.0, %v565
        %v567 = vpop.f32.mrb[0].mxu0
        %v568 = vpop.f32.mrb[0].mxu0
        %v569 = vadd.f32 0.0, %v568
        %v570 = vpop.f32.mrb[0].mxu0
        %571 = vmatprep.mubr.bf16.mxu0 0
        %572 = vmatmul.mubr.bf16.gmra.mrb[0].mxu0 %v443
        %v573 = vpop.f32.mrb[0].mxu0
        %v574 = vadd.f32 0.0, %v573
        %v575 = vpop.f32.mrb[0].mxu0
        %v576 = vpop.f32.mrb[0].mxu0
        %v577 = vadd.f32 0.0, %v576
        %v578 = vpop.f32.mrb[0].mxu0
        %579 = vmatprep.mubr.bf16.mxu0 0
        %580 = vmatmul.mubr.bf16.gmra.mrb[0].mxu0 %v446
        %v581 = vpop.f32.mrb[0].mxu0
        %v582 = vadd.f32 0.0, %v581
        %v583 = vpop.f32.mrb[0].mxu0
        %v584 = vpop.f32.mrb[0].mxu0
        %v585 = vadd.f32 0.0, %v584
        %v586 = vpop.f32.mrb[0].mxu0
        %587 = vmatprep.mubr.bf16.mxu0 0
        %588 = vmatmul.mubr.bf16.gmra.mrb[0].mxu0 %v449
        %v589 = vpop.f32.mrb[0].mxu0
        %v590 = vadd.f32 0.0, %v589
        %v591 = vpop.f32.mrb[0].mxu0
        %v592 = vpop.f32.mrb[0].mxu0
        %v593 = vadd.f32 0.0, %v592
        %v594 = vpop.f32.mrb[0].mxu0
        %595 = vmatprep.mubr.bf16.mxu0 0
        %596 = vmatmul.mubr.bf16.gmra.mrb[0].mxu0 %v452
        %v597 = vpop.f32.mrb[0].mxu0
        %v598 = vadd.f32 0.0, %v597
        %v599 = vpop.f32.mrb[0].mxu0
        %v600 = vpop.f32.mrb[0].mxu0
        %v601 = vadd.f32 0.0, %v600
        %v602 = vpop.f32.mrb[0].mxu0
        %603 = vmatprep.mubr.bf16.mxu0 0
        %604 = vmatmul.mubr.bf16.gmra.mrb[0].mxu0 %v455
        %v605 = vpop.f32.mrb[0].mxu0
        %v606 = vadd.f32 0.0, %v605
        %v607 = vpop.f32.mrb[0].mxu0
        %v608 = vpop.f32.mrb[0].mxu0
        %v609 = vadd.f32 0.0, %v608
        %v610 = vpop.f32.mrb[0].mxu0
        %611 = vmatprep.mubr.bf16.mxu0 0
        %612 = vmatmul.mubr.bf16.gmra.mrb[0].mxu0 %v458
        %v613 = vpop.f32.mrb[0].mxu0
        %v614 = vadd.f32 0.0, %v613
        %v615 = vpop.f32.mrb[0].mxu0
        %v616 = vpop.f32.mrb[0].mxu0
        %v617 = vadd.f32 0.0, %v616
        %v618 = vpop.f32.mrb[0].mxu0
        %619 = vmatprep.mubr.bf16.mxu0 0
        %620 = vmatmul.mubr.bf16.gmra.mrb[0].mxu0 %v461
        %v621 = vpop.f32.mrb[0].mxu0
        %v622 = vadd.f32 0.0, %v621
        %v623 = vpop.f32.mrb[0].mxu0
        %v624 = vpop.f32.mrb[0].mxu0
        %v625 = vadd.f32 0.0, %v624
        %v626 = vpop.f32.mrb[0].mxu0
        %627 = vdwg.mxu0
        %628 = vst [vmem:[%s249] sm:$0xff] %v502
        %629 = vst [vmem:[%s249 + $0x8] sm:$0xff] %v505
        %630 = vst [vmem:[%s249 + $0x10] sm:$0xff] %v510
        %631 = vst [vmem:[%s249 + $0x18] sm:$0xff] %v513
        %632 = vst [vmem:[%s249 + $0x20] sm:$0xff] %v518
        %633 = vst [vmem:[%s249 + $0x28] sm:$0xff] %v521
        %634 = vst [vmem:[%s249 + $0x30] sm:$0xff] %v526
        %635 = vst [vmem:[%s249 + $0x38] sm:$0xff] %v529
        %636 = vst [vmem:[%s249 + $0x40] sm:$0xff] %v534
        %637 = vst [vmem:[%s249 + $0x48] sm:$0xff] %v537
        %638 = vst [vmem:[%s249 + $0x50] sm:$0xff] %v542
        %639 = vst [vmem:[%s249 + $0x58] sm:$0xff] %v545
        %640 = vst [vmem:[%s249 + $0x60] sm:$0xff] %v550
        %641 = vst [vmem:[%s249 + $0x68] sm:$0xff] %v553
        %642 = vst [vmem:[%s249 + $0x70] sm:$0xff] %v558
        %643 = vst [vmem:[%s249 + $0x78] sm:$0xff] %v561
        %644 = vst [vmem:[%s249 + $0x80] sm:$0xff] %v566
        %645 = vst [vmem:[%s249 + $0x88] sm:$0xff] %v569
        %646 = vst [vmem:[%s249 + $0x90] sm:$0xff] %v574
        %647 = vst [vmem:[%s249 + $0x98] sm:$0xff] %v577
        %648 = vst [vmem:[%s249 + $0xa0] sm:$0xff] %v582
        %649 = vst [vmem:[%s249 + $0xa8] sm:$0xff] %v585
        %650 = vst [vmem:[%s249 + $0xb0] sm:$0xff] %v590
        %651 = vst [vmem:[%s249 + $0xb8] sm:$0xff] %v593
        %652 = vst [vmem:[%s249 + $0xc0] sm:$0xff] %v598
        %653 = vst [vmem:[%s249 + $0xc8] sm:$0xff] %v601
        %654 = vst [vmem:[%s249 + $0xd0] sm:$0xff] %v606
        %655 = vst [vmem:[%s249 + $0xd8] sm:$0xff] %v609
        %656 = vst [vmem:[%s249 + $0xe0] sm:$0xff] %v614
        %657 = vst [vmem:[%s249 + $0xe8] sm:$0xff] %v617
        %658 = vst [vmem:[%s249 + $0xf0] sm:$0xff] %v622
        %659 = vst [vmem:[%s249 + $0xf8] sm:$0xff] %v625
        %v660 = vadd.f32 %v502, %v505
        %v661 = vadd.f32 %v660, %v510
        %v662 = vadd.f32 %v661, %v513
        %v663 = vadd.f32 %v662, %v518
        %v664 = vadd.f32 %v663, %v521
        %v665 = vadd.f32 %v664, %v526
        %v666 = vadd.f32 %v665, %v529
        %v667 = vadd.f32 %v666, %v534
        %v668 = vadd.f32 %v667, %v537
        %v669 = vadd.f32 %v668, %v542
        %v670 = vadd.f32 %v669, %v545
        %v671 = vadd.f32 %v670, %v550
        %v672 = vadd.f32 %v671, %v553
        %v673 = vadd.f32 %v672, %v558
        %v674 = vadd.f32 %v673, %v561
        %v675 = vadd.f32 %v674, %v566
        %v676 = vadd.f32 %v675, %v569
        %v677 = vadd.f32 %v676, %v574
        %v678 = vadd.f32 %v677, %v577
        %v679 = vadd.f32 %v678, %v582
        %v680 = vadd.f32 %v679, %v585
        %v681 = vadd.f32 %v680, %v590
        %v682 = vadd.f32 %v681, %v593
        %v683 = vadd.f32 %v682, %v598
        %v684 = vadd.f32 %v683, %v601
        %v685 = vadd.f32 %v684, %v606
        %v686 = vadd.f32 %v685, %v609
        %v687 = vadd.f32 %v686, %v614
        %v688 = vadd.f32 %v687, %v617
        %v689 = vadd.f32 %v688, %v622
        %v690 = vadd.f32 %v689, %v625
        %v691 = vrot.slane %v690, 4
        %v692 = vadd.f32 %v690, %v691
        %v693 = vrot.slane %v692, 2
        %v694 = vadd.f32 %v692, %v693
        %v695 = vrot.slane %v694, 1
        %v696 = vadd.f32 %v694, %v695
        %v697 = vmul.f32 %v502, %v502
        %v698 = vmul.f32 %v505, %v505
        %v699 = vmul.f32 %v510, %v510
        %v700 = vmul.f32 %v513, %v513
        %v701 = vmul.f32 %v518, %v518
        %v702 = vmul.f32 %v521, %v521
        %v703 = vmul.f32 %v526, %v526
        %v704 = vmul.f32 %v529, %v529
        %v705 = vmul.f32 %v534, %v534
        %v706 = vmul.f32 %v537, %v537
        %v707 = vmul.f32 %v542, %v542
        %v708 = vmul.f32 %v545, %v545
        %v709 = vmul.f32 %v550, %v550
        %v710 = vmul.f32 %v553, %v553
        %v711 = vmul.f32 %v558, %v558
        %v712 = vmul.f32 %v561, %v561
        %v713 = vmul.f32 %v566, %v566
        %v714 = vmul.f32 %v569, %v569
        %v715 = vmul.f32 %v574, %v574
        %v716 = vmul.f32 %v577, %v577
        %v717 = vmul.f32 %v582, %v582
        %v718 = vmul.f32 %v585, %v585
        %v719 = vmul.f32 %v590, %v590
        %v720 = vmul.f32 %v593, %v593
        %v721 = vmul.f32 %v598, %v598
        %v722 = vmul.f32 %v601, %v601
        %v723 = vmul.f32 %v606, %v606
        %v724 = vmul.f32 %v609, %v609
        %v725 = vmul.f32 %v614, %v614
        %v726 = vmul.f32 %v617, %v617
        %v727 = vmul.f32 %v622, %v622
        %v728 = vmul.f32 %v625, %v625
        %v729 = vadd.f32 %v697, %v698
        %v730 = vadd.f32 %v729, %v699
        %v731 = vadd.f32 %v730, %v700
        %v732 = vadd.f32 %v731, %v701
        %v733 = vadd.f32 %v732, %v702
        %v734 = vadd.f32 %v733, %v703
        %v735 = vadd.f32 %v734, %v704
        %v736 = vadd.f32 %v735, %v705
        %v737 = vadd.f32 %v736, %v706
        %v738 = vadd.f32 %v737, %v707
        %v739 = vadd.f32 %v738, %v708
        %v740 = vadd.f32 %v739, %v709
        %v741 = vadd.f32 %v740, %v710
        %v742 = vadd.f32 %v741, %v711
        %v743 = vadd.f32 %v742, %v712
        %v744 = vadd.f32 %v743, %v713
        %v745 = vadd.f32 %v744, %v714
        %v746 = vadd.f32 %v745, %v715
        %v747 = vadd.f32 %v746, %v716
        %v748 = vadd.f32 %v747, %v717
        %v749 = vadd.f32 %v748, %v718
        %v750 = vadd.f32 %v749, %v719
        %v751 = vadd.f32 %v750, %v720
        %v752 = vadd.f32 %v751, %v721
        %v753 = vadd.f32 %v752, %v722
        %v754 = vadd.f32 %v753, %v723
        %v755 = vadd.f32 %v754, %v724
        %v756 = vadd.f32 %v755, %v725
        %v757 = vadd.f32 %v756, %v726
        %v758 = vadd.f32 %v757, %v727
        %v759 = vadd.f32 %v758, %v728
        %v760 = vrot.slane %v759, 4
        %v761 = vadd.f32 %v759, %v760
        %v762 = vrot.slane %v761, 2
        %v763 = vadd.f32 %v761, %v762
        %v764 = vrot.slane %v763, 1
        %v765 = vadd.f32 %v763, %v764
        %766 = vst [vmem:[%s256] sm:$0xff] %v696
        %767 = vst [vmem:[%s263] sm:$0xff] %v765
        %s768 = sand.u32 %s107, 1
        %s769 = scalar_lea.sflag [#allocation3], %s768
        %s770 = sand.u32 %s107, 1
        %s771 = smul.addr %s770, 256
        %s772 = scalar_lea.vmem [#allocation2], %s771
        %s773 = sand.u32 %s22, 1
        %s774 = scalar_lea.sflag [#allocation5], %s773
        %s775 = sand.u32 %s137, 1
        %s776 = smul.addr %s775, 8
        %s777 = scalar_lea.vmem [#allocation4], %s776
        %s778 = sand.u32 %s22, 1
        %s779 = scalar_lea.sflag [#allocation5], %s778
        %s780 = sand.u32 %s167, 1
        %s781 = smul.addr %s780, 8
        %s782 = scalar_lea.vmem [#allocation6], %s781
        // Predicated region
        $region29: #{tpu_custom_call.1} parent=27 // pred_check
          %p783 = pneg %p117
        $region30: #{tpu_custom_call.1} parent=27 // pred_check_branch
          %785 = sbr.rel (%p783) target = $region32
        $region31: #{tpu_custom_call.1} parent=27 // pred_region
          %s786 = smul.u32 32, %s28
          %s788 = ssub.s32 4096, 4096
          %789 = vsyncadd %s769, %s788
          %s790 = sadd.s32 %s29, %s786
          %s791 = smul.addr %s27, 32
          %s792 = sadd.s32 %s790, %s791
          %s793 = smul.addr %s792, 128
          %s794 = scalar_lea.hbm %s2, %s793
          %s795 = sshll.u32 %s772, 4
          %s796 = int_to_ptr.vmem [resolvable:$true] %s795
          %801 = dma.vmem_to_hbm [thread:$0]  %s796, 4096, %s794, %s769, 128, 128, 8
        $region32: #{tpu_custom_call.1} parent=27 // pred_fallthru
          _
        // Predicated region
        $region33: #{tpu_custom_call.1} parent=27 // pred_check
          %p802 = pneg %p147
        $region34: #{tpu_custom_call.1} parent=27 // pred_check_branch
          %804 = sbr.rel (%p802) target = $region36
        $region35: #{tpu_custom_call.1} parent=27 // pred_region
          %s805 = sadd.s32 %s27, %s28
          %s807 = ssub.s32 128, 128
          %808 = vsyncadd %s774, %s807
          %s809 = sadd.s32 %s29, %s805
          %s810 = smul.addr %s809, 128
          %s811 = scalar_lea.hbm %s3, %s810
          %s813 = sshll.u32 %s777, 4
          %s814 = int_to_ptr.vmem [resolvable:$true] %s813
          %816 = dma.vmem_to_hbm [thread:$0]  %s814, 128, %s811, %s774
        $region36: #{tpu_custom_call.1} parent=27 // pred_fallthru
          _
        // Predicated region
        $region37: #{tpu_custom_call.1} parent=27 // pred_check
          %p817 = pneg %p177
        $region38: #{tpu_custom_call.1} parent=27 // pred_check_branch
          %819 = sbr.rel (%p817) target = $region40
        $region39: #{tpu_custom_call.1} parent=27 // pred_region
          %s820 = sadd.s32 %s27, %s28
          %s822 = ssub.s32 128, 128
          %823 = vsyncadd %s779, %s822
          %s824 = sadd.s32 %s29, %s820
          %s825 = smul.addr %s824, 128
          %s826 = scalar_lea.hbm %s4, %s825
          %s828 = sshll.u32 %s782, 4
          %s829 = int_to_ptr.vmem [resolvable:$true] %s828
          %831 = dma.vmem_to_hbm [thread:$0]  %s829, 128, %s826, %s779
        $region40: #{tpu_custom_call.1} parent=27 // pred_fallthru
          _
      $region28: #{tpu_custom_call.1} parent=5 // pred_fallthru
        _
      %p832 = scmp.le.s32.totalorder 2, %s17
      // Predicated region
      $region41: #{tpu_custom_call.1} parent=5 // pred_check
        %p833 = pneg %p832
      $region42: #{tpu_custom_call.1} parent=5 // pred_check_branch
        %835 = sbr.rel (%p833) target = $region44
      $region43: #{tpu_custom_call.1} parent=5 // pred_region
        %s836 = ssub.s32 %s17, 2
        // Predicated region
        $region45: #{tpu_custom_call.1} parent=43 // pred_check
          %p837 = pneg %p123
        $region46: #{tpu_custom_call.1} parent=43 // pred_check_branch
          %839 = sbr.rel (%p837) target = $region48
        $region47: #{tpu_custom_call.1} parent=43 // pred_region
          %s840 = sand.u32 %s108, 1
          %s841 = scalar_lea.sflag [#allocation3], %s840
          %s842 = sand.u32 %s108, 1
          %s843 = smul.addr %s842, 256
          %s844 = scalar_lea.vmem [#allocation2], %s843
          %845 = dma.done %s841, 4096
        $region48: #{tpu_custom_call.1} parent=43 // pred_fallthru
          _
        // Predicated region
        $region49: #{tpu_custom_call.1} parent=43 // pred_check
          %p846 = pneg %p153
        $region50: #{tpu_custom_call.1} parent=43 // pred_check_branch
          %848 = sbr.rel (%p846) target = $region52
        $region51: #{tpu_custom_call.1} parent=43 // pred_region
          %s849 = sand.u32 %s23, 1
          %s850 = scalar_lea.sflag [#allocation5], %s849
          %s851 = sand.u32 %s138, 1
          %s852 = smul.addr %s851, 8
          %s853 = scalar_lea.vmem [#allocation4], %s852
          %854 = dma.done %s850, 128
        $region52: #{tpu_custom_call.1} parent=43 // pred_fallthru
          _
        // Predicated region
        $region53: #{tpu_custom_call.1} parent=43 // pred_check
          %p855 = pneg %p183
        $region54: #{tpu_custom_call.1} parent=43 // pred_check_branch
          %857 = sbr.rel (%p855) target = $region56
        $region55: #{tpu_custom_call.1} parent=43 // pred_region
          %s858 = sand.u32 %s23, 1
          %s859 = scalar_lea.sflag [#allocation5], %s858
          %s860 = sand.u32 %s168, 1
          %s861 = smul.addr %s860, 8
          %s862 = scalar_lea.vmem [#allocation6], %s861
          %863 = dma.done %s859, 128
        $region56: #{tpu_custom_call.1} parent=43 // pred_fallthru
          _
      $region44: #{tpu_custom_call.1} parent=5 // pred_fallthru
        _
    $region6: #{tpu_custom_call.1} parent=1 // loop_footer
      %s21 = sadd.s32 1, %s17
    $region7: #{tpu_custom_call.1} parent=1 // loop_footer_branch
      %16 = sbr.rel target = $region3
    $region8: #{tpu_custom_call.1} parent=1 // loop_exit
      _
    %864 = vsyncpa [#allocation3], 1
    %s865 = scalar_lea.sflag [#allocation3], 1
    %866 = vsyncpa %s865, 1
    %867 = vsyncpa [#allocation5], 1
    %s868 = scalar_lea.sflag [#allocation5], 1
    %869 = vsyncpa %s868, 1

</llo_original>
